<compile_context>
chip_gen: v7x
topology: tpu7x:2x2x1
jax: 0.10.0
libtpu: 0.0.40
codegen_flags: <defaults>
</compile_context>

<pallas_src>
import jax
import jax.numpy as jnp
from jax import lax
from jax.experimental import pallas as pl
from jax.experimental.pallas import tpu as pltpu


def _round_up(v, m):
    return (v + m - 1) // m * m


def _prototype_logits_kernel(x_ref, pt_ref, psq_ref, o_ref):
    x = x_ref[...]                                   # (TILE_N, D) native dtype

    # Per-tile row norm of x in f32 (small: only the (TILE_N, D) slab).
    xf = x.astype(jnp.float32)
    x_sq = jnp.sum(xf * xf, axis=1, keepdims=True)   # (TILE_N, 1)

    # 2x folded into the small operand (exact power-of-two scale).  MXU
    # consumes the native operand dtype, accumulates in f32.  RHS is already
    # (D, TILE_C): classes on lanes, no in-kernel transpose.
    cross2 = lax.dot_general(
        x + x, pt_ref[...],
        dimension_numbers=(((1,), (0,)), ((), ())),
        preferred_element_type=jnp.float32,
    )                                                # (TILE_N, TILE_C) = 2 x.p

    # logits = -(||x||^2 + ||p||^2 - 2 x.p), fused and clamped to <= 0.
    o_ref[...] = jnp.minimum(cross2 - x_sq - psq_ref[...], 0.0).astype(o_ref.dtype)


def prototype_classifier_forward(x, prototypes, *, tile_n=None, tile_c=None,
                                 out_dtype=None):
    """x: any shape flattening to (-1, D); prototypes: (C, D). Returns (N, C)."""
    num_classes, features_dim = prototypes.shape
    x2d = x.reshape(-1, features_dim)
    n = x2d.shape[0]

    out_dtype = jnp.dtype(out_dtype) if out_dtype is not None else x2d.dtype
    x_itemsize = jnp.dtype(x2d.dtype).itemsize
    p_itemsize = jnp.dtype(prototypes.dtype).itemsize
    out_itemsize = jnp.dtype(out_dtype).itemsize

    # Lane-dense class dim: pad classes to a multiple of 128 (zero rows; their
    # logits are sliced off below).  This is a tiny one-time wrapper-side op.
    c_pad = _round_up(max(num_classes, 1), 128)

    p = prototypes
    if c_pad != num_classes:
        p = jnp.pad(prototypes, ((0, c_pad - num_classes), (0, 0)))
    # One-time wrapper-side transform: MXU-natural RHS layout + hoisted norms.
    p_t = p.T                                                   # (D, c_pad)
    p_sq = jnp.sum(p.astype(jnp.float32) ** 2, axis=1)[None, :]  # (1, c_pad) f32

    # ---- tile selection -----------------------------------------------------
    # Class tile: keep the prototype slab to a few MiB per buffer so large
    # class counts still fit v7x's 64 MiB VMEM; otherwise keep all classes
    # resident (constant index map -> DMA'd once).
    if tile_c is None:
        cap = max(128, ((4 << 20) // max(1, features_dim * p_itemsize)) // 128 * 128)
        tile_c = min(c_pad, cap, 8192)
    else:
        tile_c = min(_round_up(tile_c, 128), c_pad)

    # N tile: target a ~2 MiB output tile; round to the dtype sublane pack.
    pack = max(8, 32 // x_itemsize, 32 // out_itemsize)
    if tile_n is None:
        tile_n = (2 << 20) // max(1, tile_c * out_itemsize)
        tile_n = max(256, min(2048, tile_n))
    if n <= tile_n:
        tn = n                       # single block; full-extent dims are legal
    else:
        tn = _round_up(tile_n, pack)

    grid_n = pl.cdiv(n, tn)
    grid_c = pl.cdiv(c_pad, tile_c)

    # ---- VMEM budget (actual footprint, double-buffered) --------------------
    footprint = (2 * tn * features_dim * x_itemsize          # x tiles
                 + 2 * features_dim * tile_c * p_itemsize    # prototype tiles
                 + 2 * 8 * tile_c * 4                        # p_sq tiles (padded)
                 + 2 * tn * tile_c * out_itemsize)           # output tiles
    try:
        phys_vmem = getattr(pltpu.get_tpu_info(), "vmem_capacity_bytes", 64 << 20)
    except Exception:  # pragma: no cover - conservative fallback (v7x size)
        phys_vmem = 64 << 20
    vmem_limit = int(min(max(footprint + (8 << 20), 32 << 20),
                         phys_vmem - (8 << 20)))

    cost = pl.CostEstimate(
        flops=2 * n * c_pad * features_dim,
        transcendentals=0,
        bytes_accessed=(n * features_dim * x_itemsize * grid_c
                        + c_pad * features_dim * p_itemsize
                        * (grid_n if grid_c > 1 else 1)
                        + c_pad * 4
                        + n * c_pad * out_itemsize),
    )

    out = pl.pallas_call(
        _prototype_logits_kernel,
        out_shape=jax.ShapeDtypeStruct((n, c_pad), out_dtype),
        grid=(grid_n, grid_c),
        in_specs=[
            pl.BlockSpec((tn, features_dim), lambda i, j: (i, 0)),      # x
            pl.BlockSpec((features_dim, tile_c), lambda i, j: (0, j)),  # p^T
            pl.BlockSpec((1, tile_c), lambda i, j: (0, j)),             # ||p||^2
        ],
        out_specs=pl.BlockSpec((tn, tile_c), lambda i, j: (i, j)),
        compiler_params=pltpu.CompilerParams(
            dimension_semantics=("parallel", "parallel"),
            vmem_limit_bytes=vmem_limit,
        ),
        cost_estimate=cost,
    )(x2d, p_t, p_sq)

    if c_pad != num_classes:
        out = out[:, :num_classes]
    return out


if __name__ == "__main__":
    # Small shapes consistent with the module: features_dim=32, num_classes=8,
    # batch of 4 feature vectors.
    features_dim = 32
    num_classes = 8
    batch = 4

    key = jax.random.PRNGKey(0)
    kx, kp = jax.random.split(key)
    x = jax.random.normal(kx, (batch, features_dim), dtype=jnp.float32)
    # Deterministic stand-in for torch.randn(1, features_dim) per class.
    prototypes = jax.random.normal(kp, (num_classes, features_dim), dtype=jnp.float32)

    logits = prototype_classifier_forward(x, prototypes)
    jax.block_until_ready(logits)

    # Reference check against plain JAX broadcast/reduce semantics.
    ref = -jnp.sum(
        (x.reshape(-1, 1, features_dim) - prototypes[None, :, :]) ** 2, axis=2
    )
    assert logits.shape == (batch, num_classes)
    assert jnp.allclose(logits, ref, atol=1e-4, rtol=1e-4)

    print("KERNEL_OK")
</pallas_src>

<mosaic_0001>
module attributes {stable_mosaic.version = 11 : i64} {
  func.func @_prototype_logits_kernel(%arg0: i32, %arg1: i32, %arg2: memref<4x32xf32, #tpu.memory_space<vmem>>, %arg3: memref<32x128xf32, #tpu.memory_space<vmem>>, %arg4: memref<1x128xf32, #tpu.memory_space<vmem>>, %arg5: memref<4x128xf32, #tpu.memory_space<vmem>>) attributes {dimension_semantics = [#tpu.dimension_semantics<parallel>, #tpu.dimension_semantics<parallel>], iteration_bounds = array<i64: 1, 1>, scalar_prefetch = 0 : i64, scratch_operands = 0 : i64, tpu.core_type = #tpu.core_type<tc>, window_params = [{transform_indices = @transform_0, window_bounds = array<i64: 4, 32>}, {transform_indices = @transform_1, window_bounds = array<i64: 32, 128>}, {transform_indices = @transform_2, window_bounds = array<i64: 1, 128>}, {transform_indices = @transform_3, window_bounds = array<i64: 4, 128>}]} {
    %c0 = arith.constant 0 : index
    %c0_0 = arith.constant 0 : index
    %0 = vector.load %arg2[%c0, %c0_0] : memref<4x32xf32, #tpu.memory_space<vmem>>, vector<4x32xf32>
    %1 = arith.mulf %0, %0 : vector<4x32xf32>
    %cst = arith.constant dense<0.000000e+00> : vector<4xf32>
    %2 = vector.multi_reduction <add>, %1, %cst [1] : vector<4x32xf32> to vector<4xf32>
    %3 = vector.shape_cast %2 : vector<4xf32> to vector<4x1xf32>
    %4 = arith.addf %0, %0 : vector<4x32xf32>
    %c0_1 = arith.constant 0 : index
    %c0_2 = arith.constant 0 : index
    %5 = vector.load %arg3[%c0_1, %c0_2] : memref<32x128xf32, #tpu.memory_space<vmem>>, vector<32x128xf32>
    %cst_3 = arith.constant dense<0.000000e+00> : vector<4x128xf32>
    %6 = tpu.matmul %4, %5, %cst_3 {dimension_numbers = #tpu.dot_dimension_numbers<[1], [0], [0], [1], [0, 0, 1, 1], [], []>} : vector<4x32xf32>, vector<32x128xf32>, vector<4x128xf32> -> vector<4x128xf32>
    %7 = vector.broadcast %3 : vector<4x1xf32> to vector<4x128xf32>
    %8 = arith.subf %6, %7 : vector<4x128xf32>
    %c0_4 = arith.constant 0 : index
    %c0_5 = arith.constant 0 : index
    %9 = vector.load %arg4[%c0_4, %c0_5] : memref<1x128xf32, #tpu.memory_space<vmem>>, vector<1x128xf32>
    %10 = vector.broadcast %9 : vector<1x128xf32> to vector<4x128xf32>
    %11 = arith.subf %8, %10 : vector<4x128xf32>
    %cst_6 = arith.constant 0.000000e+00 : f32
    %12 = vector.broadcast %cst_6 : f32 to vector<4x128xf32>
    %13 = arith.minimumf %11, %12 : vector<4x128xf32>
    %c0_7 = arith.constant 0 : index
    %c0_8 = arith.constant 0 : index
    %14 = vector.load %arg5[%c0_7, %c0_8] : memref<4x128xf32, #tpu.memory_space<vmem>>, vector<4x128xf32>
    tpu.vector_store %arg5[%c0_7, %c0_8], %13 {strides = array<i32>} : memref<4x128xf32, #tpu.memory_space<vmem>>, vector<4x128xf32>,
    return
  }
  func.func @transform_0(%arg0: i32, %arg1: i32) -> (i32, i32) {
    %c0_i32 = arith.constant 0 : i32
    %c0_i32_0 = arith.constant 0 : i32
    return %arg0, %c0_i32 : i32, i32
  }
  func.func @transform_1(%arg0: i32, %arg1: i32) -> (i32, i32) {
    %c0_i32 = arith.constant 0 : i32
    %c0_i32_0 = arith.constant 0 : i32
    return %c0_i32, %arg1 : i32, i32
  }
  func.func @transform_2(%arg0: i32, %arg1: i32) -> (i32, i32) {
    %c0_i32 = arith.constant 0 : i32
    %c0_i32_0 = arith.constant 0 : i32
    return %c0_i32, %arg1 : i32, i32
  }
  func.func @transform_3(%arg0: i32, %arg1: i32) -> (i32, i32) {
    %c0_i32 = arith.constant 0 : i32
    return %arg0, %arg1 : i32, i32
  }
}

</mosaic_0001>

<llo_original>
// kernel: tpu_custom_call.1
$region0: #{tpu_custom_call.1}
  #allocation0 [shape = 'u32[]', space=smem, size = 0x4, offset = 0x4, fixed_abs, tag = 'smem constant byte address 0x4 - core index']
  #allocation1 [shape = 'u32[144,128]{1,0:T(1,128)}', space=vmem, size = 0x12000, scoped, tag = 'internal scratch']
  %s0 = inlined_call_operand.hbm [shape: f32[4,32], index: 0, kind: input, shape index: {}]
  %s1 = inlined_call_operand.hbm [shape: f32[32,128], index: 1, kind: input, shape index: {}]
  %s2 = inlined_call_operand.vmem [shape: f32[1,128], index: 2, kind: input, shape index: {}]
  %s3 = inlined_call_operand.hbm [shape: f32[4,128], index: 3, kind: output, shape index: {}]
  %s4 = sld [smem:[#allocation0]]
  $region30: #{tpu_custom_call.1} parent=0
    _
  %s6 = ssub.s32 1, %s4
  %s7 = scalar_select 0, %s6, %s4
  $region1: #{tpu_custom_call.1} parent=0
    #allocation2 [shape = 'u8[2048]{0}', space=vmem, size = 0x800, scoped, tag = 'input window, operand 0, single buffered']
    #allocation3 [shape = 's32[1]{0}', space=sflag, size = 0x4, scoped, tag = 'scoped memory for tpu_custom_call.1']
    #allocation4 [shape = 's32[1]{0}', space=sflag, size = 0x4, scoped, tag = 'scoped memory for tpu_custom_call.1']
    #allocation5 [shape = 'u8[16384]{0}', space=vmem, size = 0x4000, scoped, tag = 'input window, operand 1, single buffered']
    #allocation6 [shape = 's32[1]{0}', space=sflag, size = 0x4, scoped, tag = 'scoped memory for tpu_custom_call.1']
    #allocation7 [shape = 'u8[2048]{0}', space=vmem, size = 0x800, scoped, tag = 'output window, operand 0, single buffered']
    %8 = vsyncpa [#allocation3], 0
    %9 = vsyncpa [#allocation6], 0
    %10 = vsyncpa [#allocation4], 0
    // Predicated region
    $region2: #{tpu_custom_call.1} parent=1 // pred_check
      _
    $region3: #{tpu_custom_call.1} parent=1 // pred_check_branch
      %12 = sbr.rel (0) target = $region5
    $region4: #{tpu_custom_call.1} parent=1 // pred_region
      %s14 = ssub.s32 64, 64
      %15 = vsyncadd [#allocation3], %s14
      %s17 = sshll.u32 [#allocation2], 4
      %s18 = int_to_ptr.vmem [resolvable:$true] %s17
      %20 = dma.hbm_to_vmem [thread:$0]  %s0, 64, %s18, [#allocation3]
    $region5: #{tpu_custom_call.1} parent=1 // pred_fallthru
      _
    // Predicated region
    $region6: #{tpu_custom_call.1} parent=1 // pred_check
      _
    $region7: #{tpu_custom_call.1} parent=1 // pred_check_branch
      %22 = sbr.rel (0) target = $region9
    $region8: #{tpu_custom_call.1} parent=1 // pred_region
      %s24 = ssub.s32 512, 512
      %25 = vsyncadd [#allocation6], %s24
      %s26 = sshll.u32 [#allocation5], 4
      %s27 = int_to_ptr.vmem [resolvable:$true] %s26
      %32 = dma.hbm_to_vmem [thread:$0]  %s1, 512, %s27, [#allocation6], 128, 128, 8
    $region9: #{tpu_custom_call.1} parent=1 // pred_fallthru
      _
    // Predicated region
    $region10: #{tpu_custom_call.1} parent=1 // pred_check
      _
    $region11: #{tpu_custom_call.1} parent=1 // pred_check_branch
      %34 = sbr.rel (0) target = $region13
    $region12: #{tpu_custom_call.1} parent=1 // pred_region
      _
    $region13: #{tpu_custom_call.1} parent=1 // pred_fallthru
      _
    // Predicated region
    $region14: #{tpu_custom_call.1} parent=1 // pred_check
      _
    $region15: #{tpu_custom_call.1} parent=1 // pred_check_branch
      %36 = sbr.rel (0) target = $region17
    $region16: #{tpu_custom_call.1} parent=1 // pred_region
      %37 = dma.done [#allocation3], 64
    $region17: #{tpu_custom_call.1} parent=1 // pred_fallthru
      _
    // Predicated region
    $region18: #{tpu_custom_call.1} parent=1 // pred_check
      _
    $region19: #{tpu_custom_call.1} parent=1 // pred_check_branch
      %39 = sbr.rel (0) target = $region21
    $region20: #{tpu_custom_call.1} parent=1 // pred_region
      %40 = dma.done [#allocation6], 512
    $region21: #{tpu_custom_call.1} parent=1 // pred_fallthru
      _
    %v41 = vld [vmem:[#allocation2] sm:$0xf]
    %v42 = vmul.f32 %v41, %v41
    %vm43 = vcmask 257024
    %v44 = vsel %vm43, %v42, 0.0
    %45 = vadd.xlane.f32.xlu0 %v44
    %v46 = vpop.xlane.xlu0 %45
    %v47 = vadd.f32 %v41, %v41
    %v48 = vld [vmem:[#allocation5] sm:$0xff]
    %v49 = vld [vmem:[#allocation5 + $0x8] sm:$0xff]
    %v50 = vld [vmem:[#allocation5 + $0x10] sm:$0xff]
    %v51 = vld [vmem:[#allocation5 + $0x18] sm:$0xff]
    %vm52 = vcmask 261120
    %v54 = vsel %vm52, %v47, 0
    %56 = vmatprep.subr.mxu0 0.0
    %57 = vmatpush1.msra.mxu0 %v48
    %58 = vmatprep.subr.mxu0 0.0
    %59 = vmatpush1.msra.mxu0 %v49
    %60 = vmatprep.subr.mxu0 0.0
    %61 = vmatpush1.msra.mxu0 %v50
    %62 = vmatprep.subr.mxu0 0.0
    %63 = vmatpush1.msra.mxu0 %v51
    %64 = vmatprep.subr.mxu0 0.0
    %65 = vmatpush1.msra.mxu0 0.0
    %66 = vmatprep.subr.mxu0 0.0
    %67 = vmatpush1.msra.mxu0 0.0
    %68 = vmatprep.subr.mxu0 0.0
    %69 = vmatpush1.msra.mxu0 0.0
    %70 = vmatprep.subr.mxu0 0.0
    %71 = vmatpush1.msra.mxu0 0.0
    %72 = vmatprep.subr.mxu0 0.0
    %73 = vmatpush1.msra.mxu0 0.0
    %74 = vmatprep.subr.mxu0 0.0
    %75 = vmatpush1.msra.mxu0 0.0
    %76 = vmatprep.subr.mxu0 0.0
    %77 = vmatpush1.msra.mxu0 0.0
    %78 = vmatprep.subr.mxu0 0.0
    %79 = vmatpush1.msra.mxu0 0.0
    %80 = vmatprep.subr.mxu0 0.0
    %81 = vmatpush1.msra.mxu0 0.0
    %82 = vmatprep.subr.mxu0 0.0
    %83 = vmatpush1.msra.mxu0 0.0
    %84 = vmatprep.subr.mxu0 0.0
    %85 = vmatpush1.msra.mxu0 0.0
    %86 = vmatprep.subr.mxu0 0.0
    %87 = vmatpush1.msra.mxu0 0.0
    %88 = vmatprep.subr.mxu0 0.0
    %89 = vmatpush1.msra.mxu0 0.0
    %90 = vmatprep.subr.mxu0 0.0
    %91 = vmatpush1.msra.mxu0 0.0
    %92 = vmatprep.subr.mxu0 0.0
    %93 = vmatpush1.msra.mxu0 0.0
    %94 = vmatprep.subr.mxu0 0.0
    %95 = vmatpush1.msra.mxu0 0.0
    %96 = vmatprep.subr.mxu0 0.0
    %97 = vmatpush1.msra.mxu0 0.0
    %98 = vmatprep.subr.mxu0 0.0
    %99 = vmatpush1.msra.mxu0 0.0
    %100 = vmatprep.subr.mxu0 0.0
    %101 = vmatpush1.msra.mxu0 0.0
    %102 = vmatprep.subr.mxu0 0.0
    %103 = vmatpush1.msra.mxu0 0.0
    %104 = vmatprep.subr.mxu0 0.0
    %105 = vmatpush1.msra.mxu0 0.0
    %106 = vmatprep.subr.mxu0 0.0
    %107 = vmatpush1.msra.mxu0 0.0
    %108 = vmatprep.subr.mxu0 0.0
    %109 = vmatpush1.msra.mxu0 0.0
    %110 = vmatprep.subr.mxu0 0.0
    %111 = vmatpush1.msra.mxu0 0.0
    %112 = vmatprep.subr.mxu0 0.0
    %113 = vmatpush1.msra.mxu0 0.0
    %114 = vmatprep.subr.mxu0 0.0
    %115 = vmatpush1.msra.mxu0 0.0
    %116 = vmatprep.subr.mxu0 0.0
    %117 = vmatpush1.msra.mxu0 0.0
    %118 = vmatprep.subr.mxu0 0.0
    %119 = vmatpush1.msra.mxu0 0.0
    %120 = vmatprep.mubr.f32.mxu0 0.0
    %121 = vmatmul.mubr.f32.gmra.mrb[0].mxu0 %v54
    %v122 = vpop.f32.mrb[0].mxu0
    %v123 = vadd.f32 0.0, %v122
    %v124 = vpop.f32.mrb[0].mxu0
    %125 = vdwg.mxu0
    %v126 = vsub.f32 %v123, %v46
    %v127 = vld [vmem:[%s2] sm:$0x1]
    %v129 = vlaneseq
    %v130 = vshrl.u32 %v129, 7
    %v131 = vsub.s32 0, %v130
    %v132 = vrot.slane %v127, %v131
    %v134 = vsub.f32 %v126, %v132
    %v135 = vmin.f32 %v134, 0.0
    %136 = vst [vmem:[#allocation7] sm:$0xf] %v135
    // Predicated region
    $region22: #{tpu_custom_call.1} parent=1 // pred_check
      _
    $region23: #{tpu_custom_call.1} parent=1 // pred_check_branch
      %138 = sbr.rel (0) target = $region25
    $region24: #{tpu_custom_call.1} parent=1 // pred_region
      %s140 = ssub.s32 64, 64
      %141 = vsyncadd [#allocation4], %s140
      %s143 = sshll.u32 [#allocation7], 4
      %s144 = int_to_ptr.vmem [resolvable:$true] %s143
      %146 = dma.vmem_to_hbm [thread:$0]  %s144, 64, %s3, [#allocation4]
    $region25: #{tpu_custom_call.1} parent=1 // pred_fallthru
      _
    // Predicated region
    $region26: #{tpu_custom_call.1} parent=1 // pred_check
      _
    $region27: #{tpu_custom_call.1} parent=1 // pred_check_branch
      %148 = sbr.rel (0) target = $region29
    $region28: #{tpu_custom_call.1} parent=1 // pred_region
      %149 = dma.done [#allocation4], 64
    $region29: #{tpu_custom_call.1} parent=1 // pred_fallthru
      _
    %150 = vsyncpa [#allocation3], 1
    %151 = vsyncpa [#allocation6], 1
    %152 = vsyncpa [#allocation4], 1

</llo_original>
